<compile_context>
chip_gen: v6e
topology: v6e:2x2x1
jax: 0.10.0
libtpu: 0.0.40
codegen_flags: <defaults>
</compile_context>

<pallas_src>
import functools
import math

import jax
import jax.numpy as jnp
from jax.experimental import pallas as pl
from jax.experimental.pallas import tpu as pltpu


# ----------------------------------------------------------------------------
# Tiling helpers
# ----------------------------------------------------------------------------
def _sublane_align(itemsize):
    # f32 -> 8 rows, bf16 -> 16, int8/fp8 -> 32 (sub-32-bit packs along sublanes)
    return {4: 8, 2: 16, 1: 32}.get(itemsize, 8)


def _row_tile(rows, lanes, itemsize, target_bytes):
    """Row-tile: multiple of the dtype sublane alignment, bounded by a per-block
    byte budget, capped at ~half the extent so the grid has >= 2 blocks (keeps
    both v7x TensorCores busy).  Never returns an unbounded full extent for
    large inputs; ragged last blocks are masked automatically by Pallas."""
    align = _sublane_align(itemsize)
    if rows <= align:
        return rows                       # block == full array dim: always legal
    t = (target_bytes // (itemsize * lanes)) // align * align
    t = max(t, align)
    half = -(-rows // 2)
    half = -(-half // align) * align      # round up to alignment
    return max(min(t, half), align)


# ----------------------------------------------------------------------------
# Pallas kernels
# ----------------------------------------------------------------------------
def _rbf_kernel(x_ref, w_ref, o_ref, *, a_coeffs, gamma):
    """kernelActivation hot path (lane-dense, complete-the-square form).

    x_ref: (TILE_R, L)   lane-dense activations (L = lane_repeat * C)
    w_ref: (n_basis, L)  folded + lane-tiled weight  w'_k = w_k * exp(-g*d_k^2)
    o_ref: (TILE_R, L)
    """
    x = x_ref[...].astype(jnp.float32)            # (TILE_R, L)
    w = w_ref[...].astype(jnp.float32)            # (n_basis, L)
    q = jnp.float32(-gamma) * x * x               # hoisted once per tile
    acc = jnp.zeros_like(x)
    # Static unroll over the 20 basis functions; a_k are compile-time floats.
    for k, a_k in enumerate(a_coeffs):
        acc = acc + w[k:k + 1, :] * jnp.exp(jnp.float32(a_k) * x + q)
    o_ref[...] = acc.astype(o_ref.dtype)


def _eltwise_kernel(x_ref, o_ref, *, mode):
    x = x_ref[...]
    if mode == "relu":
        o_ref[...] = jnp.maximum(x, 0)
    else:  # gelu — torch.nn.functional.gelu default is exact (erf) form
        o_ref[...] = jax.nn.gelu(x.astype(jnp.float32),
                                 approximate=False).astype(o_ref.dtype)


# ----------------------------------------------------------------------------
# Wrappers
# ----------------------------------------------------------------------------
def kernel_activation_forward(x, w_tiled, a_coeffs, gamma, lane_repeat):
    """x: (B, C); w_tiled: (n_basis, lane_repeat*C) -> (B, C)."""
    B, C = x.shape
    r = lane_repeat
    L = r * C
    nb = w_tiled.shape[0]

    # Lane-dense reshape: pad B up to a multiple of r, view as (rows, L).
    rows = -(-B // r)
    pad_b = rows * r - B
    xf = jnp.pad(x, ((0, pad_b), (0, 0))) if pad_b else x
    x2 = xf.reshape(rows, L)

    itemsize = jnp.dtype(x.dtype).itemsize
    tile_r = _row_tile(rows, L, itemsize, target_bytes=2 * 1024 * 1024)
    grid = (pl.cdiv(rows, tile_r),)

    n_elem = rows * L
    cost = pl.CostEstimate(
        flops=4 * nb * n_elem,
        transcendentals=nb * n_elem,
        bytes_accessed=2 * n_elem * itemsize + nb * L * w_tiled.dtype.itemsize)

    y2 = pl.pallas_call(
        functools.partial(_rbf_kernel, a_coeffs=a_coeffs, gamma=gamma),
        out_shape=jax.ShapeDtypeStruct((rows, L), x.dtype),
        grid=grid,
        in_specs=[
            pl.BlockSpec((tile_r, L), lambda i: (i, 0)),
            pl.BlockSpec((nb, L), lambda i: (0, 0)),   # small, resident
        ],
        out_specs=pl.BlockSpec((tile_r, L), lambda i: (i, 0)),
        compiler_params=pltpu.CompilerParams(
            dimension_semantics=("parallel",),
            vmem_limit_bytes=32 * 1024 * 1024),
        cost_estimate=cost,
    )(x2, w_tiled)

    y = y2.reshape(rows * r, C)
    if pad_b:
        y = y[:B]
    return y


def eltwise_forward(x, mode):
    """Elementwise relu/gelu on an arbitrary-shape tensor (e.g. NCHW)."""
    orig_shape = x.shape
    orig_dtype = x.dtype
    n = int(math.prod(orig_shape)) if orig_shape else 1

    # Prefer a lane width that divides n: avoids pad + trailing-slice HBM
    # round-trips on this memory-bound op.
    width = next((w for w in (1024, 512, 256, 128) if n % w == 0), 512)
    rows = -(-n // width)
    pad = rows * width - n
    flat = x.reshape(-1)
    if pad:
        flat = jnp.pad(flat, (0, pad))
    x2 = flat.reshape(rows, width)

    itemsize = jnp.dtype(orig_dtype).itemsize
    tile_r = _row_tile(rows, width, itemsize, target_bytes=4 * 1024 * 1024)
    grid = (pl.cdiv(rows, tile_r),)

    y2 = pl.pallas_call(
        functools.partial(_eltwise_kernel, mode=mode),
        out_shape=jax.ShapeDtypeStruct((rows, width), orig_dtype),
        grid=grid,
        in_specs=[pl.BlockSpec((tile_r, width), lambda i: (i, 0))],
        out_specs=pl.BlockSpec((tile_r, width), lambda i: (i, 0)),
        compiler_params=pltpu.CompilerParams(
            dimension_semantics=("parallel",),
            vmem_limit_bytes=32 * 1024 * 1024),
    )(x2)

    out = y2.reshape(-1)
    if pad:
        out = out[:n]
    return out.reshape(orig_shape)


class Activation:
    """JAX/Pallas port of the PyTorch `Activation` module."""

    def __init__(self, activation_func, filters):
        self.activation_func = activation_func
        if activation_func == "kernel":
            self.n_basis = 20
            self.span = 4.0
            self.channels = int(filters)
            step = 2.0 * self.span / (self.n_basis - 1)
            self.dict_vals = tuple(-self.span + k * step
                                   for k in range(self.n_basis))
            self.dict = jnp.asarray(self.dict_vals, dtype=jnp.float32)
            # gamma = 1 / (6 * (dict[-1] - dict[-2])**2)
            d_step = self.dict_vals[-1] - self.dict_vals[-2]
            self.gamma = 1.0 / (6.0 * d_step * d_step)
            # Complete-the-square constants: a_k = 2 * gamma * d_k (Python floats).
            self.a_coeffs = tuple(2.0 * self.gamma * d for d in self.dict_vals)

            # Deterministic init mimicking Conv1d default (uniform +/- 1/sqrt(fan_in));
            # Conv1d(C*n_basis, C, k=(1,1), groups=C) weight collapses to (C, n_basis).
            key = jax.random.PRNGKey(42)
            bound = 1.0 / (self.n_basis ** 0.5)
            self.weight = jax.random.uniform(
                key, (self.channels, self.n_basis),
                minval=-bound, maxval=bound, dtype=jnp.float32)

            # Fold exp(-gamma * d_k^2) into the weight, transpose to (n_basis, C),
            # and tile along lanes so the fast dim is a multiple of 128 (>=512).
            fold = jnp.exp(jnp.float32(-self.gamma) * self.dict * self.dict)
            weight_folded_t = jnp.transpose(self.weight * fold[None, :])  # (nb, C)
            C = self.channels
            r = 128 // math.gcd(C, 128)
            while r * C < 512:
                r *= 2
            self.lane_repeat = r
            self.weight_tiled = jnp.tile(weight_folded_t, (1, r))  # (nb, r*C)

    def __call__(self, x):
        if self.activation_func == "relu":
            return eltwise_forward(x, "relu")
        elif self.activation_func == "gelu":
            return eltwise_forward(x, "gelu")
        elif self.activation_func == "kernel":
            return kernel_activation_forward(x, self.weight_tiled,
                                             self.a_coeffs, self.gamma,
                                             self.lane_repeat)
        raise ValueError(self.activation_func)


# ----------------------------------------------------------------------------
# Pure-JAX references (for correctness checks)
# ----------------------------------------------------------------------------
def _ref_kernel_activation(x, d, w, gamma):
    diff = x[:, :, None] - d[None, None, :]
    feats = jnp.exp(-gamma * diff * diff)
    return jnp.sum(feats * w[None, :, :], axis=-1)


if __name__ == "__main__":
    key = jax.random.PRNGKey(0)
    k1, k2 = jax.random.split(key)

    # --- 'kernel' activation: x is (batch, channels) ---
    filters = 8
    B = 2
    x_kernel = jax.random.normal(k1, (B, filters), dtype=jnp.float32) * 2.0
    act_k = Activation("kernel", filters)
    y_k = jax.block_until_ready(act_k(x_kernel))
    y_k_ref = _ref_kernel_activation(x_kernel, act_k.dict, act_k.weight,
                                     act_k.gamma)
    assert y_k.shape == (B, filters)
    assert jnp.allclose(y_k, y_k_ref, atol=1e-4, rtol=1e-4)

    # --- 'relu' / 'gelu' activations on NCHW input ---
    x_nchw = jax.random.normal(k2, (2, 4, 16, 16), dtype=jnp.float32)
    y_relu = jax.block_until_ready(Activation("relu", filters)(x_nchw))
    y_gelu = jax.block_until_ready(Activation("gelu", filters)(x_nchw))
    assert jnp.allclose(y_relu, jnp.maximum(x_nchw, 0.0), atol=1e-6)
    assert jnp.allclose(y_gelu, jax.nn.gelu(x_nchw, approximate=False),
                        atol=1e-5, rtol=1e-5)

    print("KERNEL_OK")
</pallas_src>

<mosaic_0001>
module attributes {stable_mosaic.version = 11 : i64} {
  func.func @_rbf_kernel(%arg0: i32, %arg1: memref<1x512xf32, #tpu.memory_space<vmem>>, %arg2: memref<20x512xf32, #tpu.memory_space<vmem>>, %arg3: memref<1x512xf32, #tpu.memory_space<vmem>>) attributes {dimension_semantics = [#tpu.dimension_semantics<parallel>], iteration_bounds = array<i64: 1>, scalar_prefetch = 0 : i64, scratch_operands = 0 : i64, tpu.core_type = #tpu.core_type<tc>, window_params = [{transform_indices = @transform_0, window_bounds = array<i64: 1, 512>}, {pipeline_mode = #tpu.pipeline_mode<synchronous>, transform_indices = @transform_1, window_bounds = array<i64: 20, 512>}, {transform_indices = @transform_2, window_bounds = array<i64: 1, 512>}]} {
    %c0 = arith.constant 0 : index
    %c0_0 = arith.constant 0 : index
    %0 = vector.load %arg1[%c0, %c0_0] : memref<1x512xf32, #tpu.memory_space<vmem>>, vector<1x512xf32>
    %c0_1 = arith.constant 0 : index
    %c0_2 = arith.constant 0 : index
    %1 = vector.load %arg2[%c0_1, %c0_2] : memref<20x512xf32, #tpu.memory_space<vmem>>, vector<20x512xf32>
    %cst = arith.constant -0.940104186 : f32
    %2 = vector.broadcast %cst : f32 to vector<1x512xf32>
    %3 = arith.mulf %2, %0 : vector<1x512xf32>
    %4 = arith.mulf %3, %0 : vector<1x512xf32>
    %cst_3 = arith.constant 0.000000e+00 : f32
    %5 = vector.broadcast %cst_3 : f32 to vector<1x512xf32>
    %6 = vector.extract_strided_slice %1 {offsets = [0, 0], sizes = [1, 512], strides = [1, 1]} : vector<20x512xf32> to vector<1x512xf32>
    %cst_4 = arith.constant -7.52083349 : f32
    %7 = vector.broadcast %cst_4 : f32 to vector<1x512xf32>
    %8 = arith.mulf %7, %0 : vector<1x512xf32>
    %9 = arith.addf %8, %4 : vector<1x512xf32>
    %10 = math.exp %9 : vector<1x512xf32>
    %11 = arith.mulf %6, %10 : vector<1x512xf32>
    %12 = arith.addf %5, %11 : vector<1x512xf32>
    %13 = vector.extract_strided_slice %1 {offsets = [1, 0], sizes = [1, 512], strides = [1, 1]} : vector<20x512xf32> to vector<1x512xf32>
    %cst_5 = arith.constant -6.72916651 : f32
    %14 = vector.broadcast %cst_5 : f32 to vector<1x512xf32>
    %15 = arith.mulf %14, %0 : vector<1x512xf32>
    %16 = arith.addf %15, %4 : vector<1x512xf32>
    %17 = math.exp %16 : vector<1x512xf32>
    %18 = arith.mulf %13, %17 : vector<1x512xf32>
    %19 = arith.addf %12, %18 : vector<1x512xf32>
    %20 = vector.extract_strided_slice %1 {offsets = [2, 0], sizes = [1, 512], strides = [1, 1]} : vector<20x512xf32> to vector<1x512xf32>
    %cst_6 = arith.constant -5.937500e+00 : f32
    %21 = vector.broadcast %cst_6 : f32 to vector<1x512xf32>
    %22 = arith.mulf %21, %0 : vector<1x512xf32>
    %23 = arith.addf %22, %4 : vector<1x512xf32>
    %24 = math.exp %23 : vector<1x512xf32>
    %25 = arith.mulf %20, %24 : vector<1x512xf32>
    %26 = arith.addf %19, %25 : vector<1x512xf32>
    %27 = vector.extract_strided_slice %1 {offsets = [3, 0], sizes = [1, 512], strides = [1, 1]} : vector<20x512xf32> to vector<1x512xf32>
    %cst_7 = arith.constant -5.14583349 : f32
    %28 = vector.broadcast %cst_7 : f32 to vector<1x512xf32>
    %29 = arith.mulf %28, %0 : vector<1x512xf32>
    %30 = arith.addf %29, %4 : vector<1x512xf32>
    %31 = math.exp %30 : vector<1x512xf32>
    %32 = arith.mulf %27, %31 : vector<1x512xf32>
    %33 = arith.addf %26, %32 : vector<1x512xf32>
    %34 = vector.extract_strided_slice %1 {offsets = [4, 0], sizes = [1, 512], strides = [1, 1]} : vector<20x512xf32> to vector<1x512xf32>
    %cst_8 = arith.constant -4.35416651 : f32
    %35 = vector.broadcast %cst_8 : f32 to vector<1x512xf32>
    %36 = arith.mulf %35, %0 : vector<1x512xf32>
    %37 = arith.addf %36, %4 : vector<1x512xf32>
    %38 = math.exp %37 : vector<1x512xf32>
    %39 = arith.mulf %34, %38 : vector<1x512xf32>
    %40 = arith.addf %33, %39 : vector<1x512xf32>
    %41 = vector.extract_strided_slice %1 {offsets = [5, 0], sizes = [1, 512], strides = [1, 1]} : vector<20x512xf32> to vector<1x512xf32>
    %cst_9 = arith.constant -3.562500e+00 : f32
    %42 = vector.broadcast %cst_9 : f32 to vector<1x512xf32>
    %43 = arith.mulf %42, %0 : vector<1x512xf32>
    %44 = arith.addf %43, %4 : vector<1x512xf32>
    %45 = math.exp %44 : vector<1x512xf32>
    %46 = arith.mulf %41, %45 : vector<1x512xf32>
    %47 = arith.addf %40, %46 : vector<1x512xf32>
    %48 = vector.extract_strided_slice %1 {offsets = [6, 0], sizes = [1, 512], strides = [1, 1]} : vector<20x512xf32> to vector<1x512xf32>
    %cst_10 = arith.constant -2.77083325 : f32
    %49 = vector.broadcast %cst_10 : f32 to vector<1x512xf32>
    %50 = arith.mulf %49, %0 : vector<1x512xf32>
    %51 = arith.addf %50, %4 : vector<1x512xf32>
    %52 = math.exp %51 : vector<1x512xf32>
    %53 = arith.mulf %48, %52 : vector<1x512xf32>
    %54 = arith.addf %47, %53 : vector<1x512xf32>
    %55 = vector.extract_strided_slice %1 {offsets = [7, 0], sizes = [1, 512], strides = [1, 1]} : vector<20x512xf32> to vector<1x512xf32>
    %cst_11 = arith.constant -1.97916663 : f32
    %56 = vector.broadcast %cst_11 : f32 to vector<1x512xf32>
    %57 = arith.mulf %56, %0 : vector<1x512xf32>
    %58 = arith.addf %57, %4 : vector<1x512xf32>
    %59 = math.exp %58 : vector<1x512xf32>
    %60 = arith.mulf %55, %59 : vector<1x512xf32>
    %61 = arith.addf %54, %60 : vector<1x512xf32>
    %62 = vector.extract_strided_slice %1 {offsets = [8, 0], sizes = [1, 512], strides = [1, 1]} : vector<20x512xf32> to vector<1x512xf32>
    %cst_12 = arith.constant -1.187500e+00 : f32
    %63 = vector.broadcast %cst_12 : f32 to vector<1x512xf32>
    %64 = arith.mulf %63, %0 : vector<1x512xf32>
    %65 = arith.addf %64, %4 : vector<1x512xf32>
    %66 = math.exp %65 : vector<1x512xf32>
    %67 = arith.mulf %62, %66 : vector<1x512xf32>
    %68 = arith.addf %61, %67 : vector<1x512xf32>
    %69 = vector.extract_strided_slice %1 {offsets = [9, 0], sizes = [1, 512], strides = [1, 1]} : vector<20x512xf32> to vector<1x512xf32>
    %cst_13 = arith.constant -0.395833343 : f32
    %70 = vector.broadcast %cst_13 : f32 to vector<1x512xf32>
    %71 = arith.mulf %70, %0 : vector<1x512xf32>
    %72 = arith.addf %71, %4 : vector<1x512xf32>
    %73 = math.exp %72 : vector<1x512xf32>
    %74 = arith.mulf %69, %73 : vector<1x512xf32>
    %75 = arith.addf %68, %74 : vector<1x512xf32>
    %76 = vector.extract_strided_slice %1 {offsets = [10, 0], sizes = [1, 512], strides = [1, 1]} : vector<20x512xf32> to vector<1x512xf32>
    %cst_14 = arith.constant 0.395833343 : f32
    %77 = vector.broadcast %cst_14 : f32 to vector<1x512xf32>
    %78 = arith.mulf %77, %0 : vector<1x512xf32>
    %79 = arith.addf %78, %4 : vector<1x512xf32>
    %80 = math.exp %79 : vector<1x512xf32>
    %81 = arith.mulf %76, %80 : vector<1x512xf32>
    %82 = arith.addf %75, %81 : vector<1x512xf32>
    %83 = vector.extract_strided_slice %1 {offsets = [11, 0], sizes = [1, 512], strides = [1, 1]} : vector<20x512xf32> to vector<1x512xf32>
    %cst_15 = arith.constant 1.187500e+00 : f32
    %84 = vector.broadcast %cst_15 : f32 to vector<1x512xf32>
    %85 = arith.mulf %84, %0 : vector<1x512xf32>
    %86 = arith.addf %85, %4 : vector<1x512xf32>
    %87 = math.exp %86 : vector<1x512xf32>
    %88 = arith.mulf %83, %87 : vector<1x512xf32>
    %89 = arith.addf %82, %88 : vector<1x512xf32>
    %90 = vector.extract_strided_slice %1 {offsets = [12, 0], sizes = [1, 512], strides = [1, 1]} : vector<20x512xf32> to vector<1x512xf32>
    %cst_16 = arith.constant 1.97916663 : f32
    %91 = vector.broadcast %cst_16 : f32 to vector<1x512xf32>
    %92 = arith.mulf %91, %0 : vector<1x512xf32>
    %93 = arith.addf %92, %4 : vector<1x512xf32>
    %94 = math.exp %93 : vector<1x512xf32>
    %95 = arith.mulf %90, %94 : vector<1x512xf32>
    %96 = arith.addf %89, %95 : vector<1x512xf32>
    %97 = vector.extract_strided_slice %1 {offsets = [13, 0], sizes = [1, 512], strides = [1, 1]} : vector<20x512xf32> to vector<1x512xf32>
    %cst_17 = arith.constant 2.77083325 : f32
    %98 = vector.broadcast %cst_17 : f32 to vector<1x512xf32>
    %99 = arith.mulf %98, %0 : vector<1x512xf32>
    %100 = arith.addf %99, %4 : vector<1x512xf32>
    %101 = math.exp %100 : vector<1x512xf32>
    %102 = arith.mulf %97, %101 : vector<1x512xf32>
    %103 = arith.addf %96, %102 : vector<1x512xf32>
    %104 = vector.extract_strided_slice %1 {offsets = [14, 0], sizes = [1, 512], strides = [1, 1]} : vector<20x512xf32> to vector<1x512xf32>
    %cst_18 = arith.constant 3.562500e+00 : f32
    %105 = vector.broadcast %cst_18 : f32 to vector<1x512xf32>
    %106 = arith.mulf %105, %0 : vector<1x512xf32>
    %107 = arith.addf %106, %4 : vector<1x512xf32>
    %108 = math.exp %107 : vector<1x512xf32>
    %109 = arith.mulf %104, %108 : vector<1x512xf32>
    %110 = arith.addf %103, %109 : vector<1x512xf32>
    %111 = vector.extract_strided_slice %1 {offsets = [15, 0], sizes = [1, 512], strides = [1, 1]} : vector<20x512xf32> to vector<1x512xf32>
    %cst_19 = arith.constant 4.35416651 : f32
    %112 = vector.broadcast %cst_19 : f32 to vector<1x512xf32>
    %113 = arith.mulf %112, %0 : vector<1x512xf32>
    %114 = arith.addf %113, %4 : vector<1x512xf32>
    %115 = math.exp %114 : vector<1x512xf32>
    %116 = arith.mulf %111, %115 : vector<1x512xf32>
    %117 = arith.addf %110, %116 : vector<1x512xf32>
    %118 = vector.extract_strided_slice %1 {offsets = [16, 0], sizes = [1, 512], strides = [1, 1]} : vector<20x512xf32> to vector<1x512xf32>
    %cst_20 = arith.constant 5.14583349 : f32
    %119 = vector.broadcast %cst_20 : f32 to vector<1x512xf32>
    %120 = arith.mulf %119, %0 : vector<1x512xf32>
    %121 = arith.addf %120, %4 : vector<1x512xf32>
    %122 = math.exp %121 : vector<1x512xf32>
    %123 = arith.mulf %118, %122 : vector<1x512xf32>
    %124 = arith.addf %117, %123 : vector<1x512xf32>
    %125 = vector.extract_strided_slice %1 {offsets = [17, 0], sizes = [1, 512], strides = [1, 1]} : vector<20x512xf32> to vector<1x512xf32>
    %cst_21 = arith.constant 5.937500e+00 : f32
    %126 = vector.broadcast %cst_21 : f32 to vector<1x512xf32>
    %127 = arith.mulf %126, %0 : vector<1x512xf32>
    %128 = arith.addf %127, %4 : vector<1x512xf32>
    %129 = math.exp %128 : vector<1x512xf32>
    %130 = arith.mulf %125, %129 : vector<1x512xf32>
    %131 = arith.addf %124, %130 : vector<1x512xf32>
    %132 = vector.extract_strided_slice %1 {offsets = [18, 0], sizes = [1, 512], strides = [1, 1]} : vector<20x512xf32> to vector<1x512xf32>
    %cst_22 = arith.constant 6.72916651 : f32
    %133 = vector.broadcast %cst_22 : f32 to vector<1x512xf32>
    %134 = arith.mulf %133, %0 : vector<1x512xf32>
    %135 = arith.addf %134, %4 : vector<1x512xf32>
    %136 = math.exp %135 : vector<1x512xf32>
    %137 = arith.mulf %132, %136 : vector<1x512xf32>
    %138 = arith.addf %131, %137 : vector<1x512xf32>
    %139 = vector.extract_strided_slice %1 {offsets = [19, 0], sizes = [1, 512], strides = [1, 1]} : vector<20x512xf32> to vector<1x512xf32>
    %cst_23 = arith.constant 7.52083349 : f32
    %140 = vector.broadcast %cst_23 : f32 to vector<1x512xf32>
    %141 = arith.mulf %140, %0 : vector<1x512xf32>
    %142 = arith.addf %141, %4 : vector<1x512xf32>
    %143 = math.exp %142 : vector<1x512xf32>
    %144 = arith.mulf %139, %143 : vector<1x512xf32>
    %145 = arith.addf %138, %144 : vector<1x512xf32>
    %c0_24 = arith.constant 0 : index
    %c0_25 = arith.constant 0 : index
    %146 = vector.load %arg3[%c0_24, %c0_25] : memref<1x512xf32, #tpu.memory_space<vmem>>, vector<1x512xf32>
    tpu.vector_store %arg3[%c0_24, %c0_25], %145 {strides = array<i32>} : memref<1x512xf32, #tpu.memory_space<vmem>>, vector<1x512xf32>,
    return
  }
  func.func @transform_0(%arg0: i32) -> (i32, i32) {
    %c0_i32 = arith.constant 0 : i32
    %c0_i32_0 = arith.constant 0 : i32
    return %arg0, %c0_i32 : i32, i32
  }
  func.func @transform_1(%arg0: i32) -> (i32, i32) {
    %c0_i32 = arith.constant 0 : i32
    %c0_i32_0 = arith.constant 0 : i32
    %c0_i32_1 = arith.constant 0 : i32
    return %c0_i32, %c0_i32_0 : i32, i32
  }
  func.func @transform_2(%arg0: i32) -> (i32, i32) {
    %c0_i32 = arith.constant 0 : i32
    %c0_i32_0 = arith.constant 0 : i32
    return %arg0, %c0_i32 : i32, i32
  }
}

</mosaic_0001>

<llo_original>
// kernel: tpu_custom_call.1
$region0: #{tpu_custom_call.1}
  #allocation0 [shape = 'u32[]', space=smem, size = 0x4, offset = 0x4, fixed_abs, tag = 'smem constant byte address 0x4 - core index']
  #allocation1 [shape = 'u32[144,128]{1,0:T(1,128)}', space=vmem, size = 0x12000, scoped, tag = 'internal scratch']
  %s0 = inlined_call_operand.hbm [shape: f32[1,512], index: 0, kind: input, shape index: {}]
  %s1 = inlined_call_operand.hbm [shape: f32[20,512], index: 1, kind: input, shape index: {}]
  %s2 = inlined_call_operand.hbm [shape: f32[1,512], index: 2, kind: output, shape index: {}]
  %s3 = sld [smem:[#allocation0]]
  $region26: #{tpu_custom_call.1} parent=0
    _
  %s5 = ssub.s32 1, %s3
  %s6 = scalar_select 0, %s5, %s3
  $region1: #{tpu_custom_call.1} parent=0
    #allocation2 [shape = 'u8[2048]{0}', space=vmem, size = 0x800, scoped, tag = 'input window, operand 0, single buffered']
    #allocation3 [shape = 's32[1]{0}', space=sflag, size = 0x4, scoped, tag = 'scoped memory for tpu_custom_call.1']
    #allocation4 [shape = 's32[1]{0}', space=sflag, size = 0x4, scoped, tag = 'scoped memory for tpu_custom_call.1']
    #allocation5 [shape = 'u8[49152]{0}', space=vmem, size = 0xc000, scoped, tag = 'input window, operand 1, single buffered']
    #allocation6 [shape = 's32[1]{0}', space=sflag, size = 0x4, scoped, tag = 'scoped memory for tpu_custom_call.1']
    #allocation7 [shape = 'u8[2048]{0}', space=vmem, size = 0x800, scoped, tag = 'output window, operand 0, single buffered']
    %7 = vsyncpa [#allocation3], 0
    %8 = vsyncpa [#allocation6], 0
    %9 = vsyncpa [#allocation4], 0
    // Predicated region
    $region2: #{tpu_custom_call.1} parent=1 // pred_check
      _
    $region3: #{tpu_custom_call.1} parent=1 // pred_check_branch
      %11 = sbr.rel (0) target = $region5
    $region4: #{tpu_custom_call.1} parent=1 // pred_region
      %s13 = ssub.s32 64, 64
      %14 = vsyncadd [#allocation3], %s13
      %s16 = sshll.u32 [#allocation2], 4
      %s17 = int_to_ptr.vmem [resolvable:$true] %s16
      %19 = dma.hbm_to_vmem [thread:$0]  %s0, 64, %s17, [#allocation3]
    $region5: #{tpu_custom_call.1} parent=1 // pred_fallthru
      _
    // Predicated region
    $region6: #{tpu_custom_call.1} parent=1 // pred_check
      _
    $region7: #{tpu_custom_call.1} parent=1 // pred_check_branch
      %21 = sbr.rel (0) target = $region9
    $region8: #{tpu_custom_call.1} parent=1 // pred_region
      %s23 = ssub.s32 1536, 1536
      %24 = vsyncadd [#allocation6], %s23
      %s25 = sshll.u32 [#allocation5], 4
      %s26 = int_to_ptr.vmem [resolvable:$true] %s25
      %31 = dma.hbm_to_vmem [thread:$0]  %s1, 1536, %s26, [#allocation6], 512, 512, 32
    $region9: #{tpu_custom_call.1} parent=1 // pred_fallthru
      _
    // Predicated region
    $region10: #{tpu_custom_call.1} parent=1 // pred_check
      _
    $region11: #{tpu_custom_call.1} parent=1 // pred_check_branch
      %33 = sbr.rel (0) target = $region13
    $region12: #{tpu_custom_call.1} parent=1 // pred_region
      %34 = dma.done [#allocation3], 64
    $region13: #{tpu_custom_call.1} parent=1 // pred_fallthru
      _
    // Predicated region
    $region14: #{tpu_custom_call.1} parent=1 // pred_check
      _
    $region15: #{tpu_custom_call.1} parent=1 // pred_check_branch
      %36 = sbr.rel (0) target = $region17
    $region16: #{tpu_custom_call.1} parent=1 // pred_region
      %37 = dma.done [#allocation6], 1536
    $region17: #{tpu_custom_call.1} parent=1 // pred_fallthru
      _
    %v38 = vld [vmem:[#allocation2] sm:$0xf]
    %v39 = vld [vmem:[#allocation5] sm:$0xff]
    %v40 = vld [vmem:[#allocation5 + $0x8] sm:$0xff]
    %v41 = vld [vmem:[#allocation5 + $0x10] sm:$0xff]
    %v42 = vld [vmem:[#allocation5 + $0x18] sm:$0xff]
    %v43 = vld [vmem:[#allocation5 + $0x20] sm:$0xff]
    %v44 = vld [vmem:[#allocation5 + $0x28] sm:$0xff]
    %v45 = vld [vmem:[#allocation5 + $0x30] sm:$0xff]
    %v46 = vld [vmem:[#allocation5 + $0x38] sm:$0xff]
    %v47 = vld [vmem:[#allocation5 + $0x40] sm:$0xf]
    %v48 = vld [vmem:[#allocation5 + $0x48] sm:$0xf]
    %v49 = vld [vmem:[#allocation5 + $0x50] sm:$0xf]
    %v50 = vld [vmem:[#allocation5 + $0x58] sm:$0xf]
    %v51 = vmul.f32 %v38, -0.9401042
    %v52 = vmul.f32 %v51, %v38
    %v53 = vmul.f32 %v38, -7.5208335
    %v54 = vadd.f32 %v53, %v52
    %v55 = vmul.f32 %v54, 1.442695
    %v56 = vpow.pop %v55
    %v58 = vlaneseq
    %v59 = vshrl.u32 %v58, 7
    %v60 = vsub.s32 0, %v59
    %v61 = vrot.slane %v56, %v60
    %v62 = vlaneseq
    %v63 = vshrl.u32 %v62, 7
    %v64 = vsub.s32 1, %v63
    %v65 = vrot.slane %v56, %v64
    %v66 = vlaneseq
    %v67 = vshrl.u32 %v66, 7
    %v68 = vsub.s32 2, %v67
    %v69 = vrot.slane %v56, %v68
    %v70 = vlaneseq
    %v71 = vshrl.u32 %v70, 7
    %v72 = vsub.s32 3, %v71
    %v73 = vrot.slane %v56, %v72
    %v78 = vmul.f32 %v39, %v61
    %v79 = vmul.f32 %v40, %v65
    %v80 = vmul.f32 %v41, %v69
    %v81 = vmul.f32 %v42, %v73
    %v82 = vadd.f32 %v78, 0.0
    %v83 = vadd.f32 %v79, 0.0
    %v84 = vadd.f32 %v80, 0.0
    %v85 = vadd.f32 %v81, 0.0
    %v86 = vmul.f32 %v38, -6.7291665
    %v87 = vadd.f32 %v86, %v52
    %v88 = vmul.f32 %v87, 1.442695
    %v89 = vpow.pop %v88
    %v91 = vlaneseq
    %v92 = vshrl.u32 %v91, 7
    %v93 = vsub.s32 0, %v92
    %v94 = vrot.slane %v89, %v93
    %v95 = vlaneseq
    %v96 = vshrl.u32 %v95, 7
    %v97 = vsub.s32 1, %v96
    %v98 = vrot.slane %v89, %v97
    %v99 = vlaneseq
    %v100 = vshrl.u32 %v99, 7
    %v101 = vsub.s32 2, %v100
    %v102 = vrot.slane %v89, %v101
    %v103 = vlaneseq
    %v104 = vshrl.u32 %v103, 7
    %v105 = vsub.s32 3, %v104
    %v106 = vrot.slane %v89, %v105
    %v111 = vmul.f32 %v39, %v94
    %v112 = vmul.f32 %v40, %v98
    %v113 = vmul.f32 %v41, %v102
    %v114 = vmul.f32 %v42, %v106
    %v119 = vrot.slane %v111, 1
    %v120 = vrot.slane %v112, 1
    %v121 = vrot.slane %v113, 1
    %v122 = vrot.slane %v114, 1
    %v127 = vadd.f32 %v82, %v119
    %v128 = vadd.f32 %v83, %v120
    %v129 = vadd.f32 %v84, %v121
    %v130 = vadd.f32 %v85, %v122
    %v131 = vmul.f32 %v38, -5.9375
    %v132 = vadd.f32 %v131, %v52
    %v133 = vmul.f32 %v132, 1.442695
    %v134 = vpow.pop %v133
    %v136 = vlaneseq
    %v137 = vshrl.u32 %v136, 7
    %v138 = vsub.s32 0, %v137
    %v139 = vrot.slane %v134, %v138
    %v140 = vlaneseq
    %v141 = vshrl.u32 %v140, 7
    %v142 = vsub.s32 1, %v141
    %v143 = vrot.slane %v134, %v142
    %v144 = vlaneseq
    %v145 = vshrl.u32 %v144, 7
    %v146 = vsub.s32 2, %v145
    %v147 = vrot.slane %v134, %v146
    %v148 = vlaneseq
    %v149 = vshrl.u32 %v148, 7
    %v150 = vsub.s32 3, %v149
    %v151 = vrot.slane %v134, %v150
    %v156 = vmul.f32 %v39, %v139
    %v157 = vmul.f32 %v40, %v143
    %v158 = vmul.f32 %v41, %v147
    %v159 = vmul.f32 %v42, %v151
    %v164 = vrot.slane %v156, 2
    %v165 = vrot.slane %v157, 2
    %v166 = vrot.slane %v158, 2
    %v167 = vrot.slane %v159, 2
    %v172 = vadd.f32 %v127, %v164
    %v173 = vadd.f32 %v128, %v165
    %v174 = vadd.f32 %v129, %v166
    %v175 = vadd.f32 %v130, %v167
    %v176 = vmul.f32 %v38, -5.1458335
    %v177 = vadd.f32 %v176, %v52
    %v178 = vmul.f32 %v177, 1.442695
    %v179 = vpow.pop %v178
    %v181 = vlaneseq
    %v182 = vshrl.u32 %v181, 7
    %v183 = vsub.s32 0, %v182
    %v184 = vrot.slane %v179, %v183
    %v185 = vlaneseq
    %v186 = vshrl.u32 %v185, 7
    %v187 = vsub.s32 1, %v186
    %v188 = vrot.slane %v179, %v187
    %v189 = vlaneseq
    %v190 = vshrl.u32 %v189, 7
    %v191 = vsub.s32 2, %v190
    %v192 = vrot.slane %v179, %v191
    %v193 = vlaneseq
    %v194 = vshrl.u32 %v193, 7
    %v195 = vsub.s32 3, %v194
    %v196 = vrot.slane %v179, %v195
    %v201 = vmul.f32 %v39, %v184
    %v202 = vmul.f32 %v40, %v188
    %v203 = vmul.f32 %v41, %v192
    %v204 = vmul.f32 %v42, %v196
    %v209 = vrot.slane %v201, 3
    %v210 = vrot.slane %v202, 3
    %v211 = vrot.slane %v203, 3
    %v212 = vrot.slane %v204, 3
    %v217 = vadd.f32 %v172, %v209
    %v218 = vadd.f32 %v173, %v210
    %v219 = vadd.f32 %v174, %v211
    %v220 = vadd.f32 %v175, %v212
    %v221 = vmul.f32 %v38, -4.3541665
    %v222 = vadd.f32 %v221, %v52
    %v223 = vmul.f32 %v222, 1.442695
    %v224 = vpow.pop %v223
    %v226 = vlaneseq
    %v227 = vshrl.u32 %v226, 7
    %v228 = vsub.s32 0, %v227
    %v229 = vrot.slane %v224, %v228
    %v230 = vlaneseq
    %v231 = vshrl.u32 %v230, 7
    %v232 = vsub.s32 1, %v231
    %v233 = vrot.slane %v224, %v232
    %v234 = vlaneseq
    %v235 = vshrl.u32 %v234, 7
    %v236 = vsub.s32 2, %v235
    %v237 = vrot.slane %v224, %v236
    %v238 = vlaneseq
    %v239 = vshrl.u32 %v238, 7
    %v240 = vsub.s32 3, %v239
    %v241 = vrot.slane %v224, %v240
    %v246 = vmul.f32 %v39, %v229
    %v247 = vmul.f32 %v40, %v233
    %v248 = vmul.f32 %v41, %v237
    %v249 = vmul.f32 %v42, %v241
    %v254 = vrot.slane %v246, 4
    %v255 = vrot.slane %v247, 4
    %v256 = vrot.slane %v248, 4
    %v257 = vrot.slane %v249, 4
    %v262 = vadd.f32 %v217, %v254
    %v263 = vadd.f32 %v218, %v255
    %v264 = vadd.f32 %v219, %v256
    %v265 = vadd.f32 %v220, %v257
    %v266 = vmul.f32 %v38, -3.5625
    %v267 = vadd.f32 %v266, %v52
    %v268 = vmul.f32 %v267, 1.442695
    %v269 = vpow.pop %v268
    %v271 = vlaneseq
    %v272 = vshrl.u32 %v271, 7
    %v273 = vsub.s32 0, %v272
    %v274 = vrot.slane %v269, %v273
    %v275 = vlaneseq
    %v276 = vshrl.u32 %v275, 7
    %v277 = vsub.s32 1, %v276
    %v278 = vrot.slane %v269, %v277
    %v279 = vlaneseq
    %v280 = vshrl.u32 %v279, 7
    %v281 = vsub.s32 2, %v280
    %v282 = vrot.slane %v269, %v281
    %v283 = vlaneseq
    %v284 = vshrl.u32 %v283, 7
    %v285 = vsub.s32 3, %v284
    %v286 = vrot.slane %v269, %v285
    %v291 = vmul.f32 %v39, %v274
    %v292 = vmul.f32 %v40, %v278
    %v293 = vmul.f32 %v41, %v282
    %v294 = vmul.f32 %v42, %v286
    %v299 = vrot.slane %v291, 5
    %v300 = vrot.slane %v292, 5
    %v301 = vrot.slane %v293, 5
    %v302 = vrot.slane %v294, 5
    %v307 = vadd.f32 %v262, %v299
    %v308 = vadd.f32 %v263, %v300
    %v309 = vadd.f32 %v264, %v301
    %v310 = vadd.f32 %v265, %v302
    %v311 = vmul.f32 %v38, -2.7708333
    %v312 = vadd.f32 %v311, %v52
    %v313 = vmul.f32 %v312, 1.442695
    %v314 = vpow.pop %v313
    %v316 = vlaneseq
    %v317 = vshrl.u32 %v316, 7
    %v318 = vsub.s32 0, %v317
    %v319 = vrot.slane %v314, %v318
    %v320 = vlaneseq
    %v321 = vshrl.u32 %v320, 7
    %v322 = vsub.s32 1, %v321
    %v323 = vrot.slane %v314, %v322
    %v324 = vlaneseq
    %v325 = vshrl.u32 %v324, 7
    %v326 = vsub.s32 2, %v325
    %v327 = vrot.slane %v314, %v326
    %v328 = vlaneseq
    %v329 = vshrl.u32 %v328, 7
    %v330 = vsub.s32 3, %v329
    %v331 = vrot.slane %v314, %v330
    %v336 = vmul.f32 %v39, %v319
    %v337 = vmul.f32 %v40, %v323
    %v338 = vmul.f32 %v41, %v327
    %v339 = vmul.f32 %v42, %v331
    %v344 = vrot.slane %v336, 6
    %v345 = vrot.slane %v337, 6
    %v346 = vrot.slane %v338, 6
    %v347 = vrot.slane %v339, 6
    %v352 = vadd.f32 %v307, %v344
    %v353 = vadd.f32 %v308, %v345
    %v354 = vadd.f32 %v309, %v346
    %v355 = vadd.f32 %v310, %v347
    %v356 = vmul.f32 %v38, -1.9791666
    %v357 = vadd.f32 %v356, %v52
    %v358 = vmul.f32 %v357, 1.442695
    %v359 = vpow.pop %v358
    %v361 = vlaneseq
    %v362 = vshrl.u32 %v361, 7
    %v363 = vsub.s32 0, %v362
    %v364 = vrot.slane %v359, %v363
    %v365 = vlaneseq
    %v366 = vshrl.u32 %v365, 7
    %v367 = vsub.s32 1, %v366
    %v368 = vrot.slane %v359, %v367
    %v369 = vlaneseq
    %v370 = vshrl.u32 %v369, 7
    %v371 = vsub.s32 2, %v370
    %v372 = vrot.slane %v359, %v371
    %v373 = vlaneseq
    %v374 = vshrl.u32 %v373, 7
    %v375 = vsub.s32 3, %v374
    %v376 = vrot.slane %v359, %v375
    %v381 = vmul.f32 %v39, %v364
    %v382 = vmul.f32 %v40, %v368
    %v383 = vmul.f32 %v41, %v372
    %v384 = vmul.f32 %v42, %v376
    %v389 = vrot.slane %v381, 7
    %v390 = vrot.slane %v382, 7
    %v391 = vrot.slane %v383, 7
    %v392 = vrot.slane %v384, 7
    %v397 = vadd.f32 %v352, %v389
    %v398 = vadd.f32 %v353, %v390
    %v399 = vadd.f32 %v354, %v391
    %v400 = vadd.f32 %v355, %v392
    %v401 = vmul.f32 %v38, -1.1875
    %v402 = vadd.f32 %v401, %v52
    %v403 = vmul.f32 %v402, 1.442695
    %v404 = vpow.pop %v403
    %v406 = vlaneseq
    %v407 = vshrl.u32 %v406, 7
    %v408 = vsub.s32 0, %v407
    %v409 = vrot.slane %v404, %v408
    %v410 = vlaneseq
    %v411 = vshrl.u32 %v410, 7
    %v412 = vsub.s32 1, %v411
    %v413 = vrot.slane %v404, %v412
    %v414 = vlaneseq
    %v415 = vshrl.u32 %v414, 7
    %v416 = vsub.s32 2, %v415
    %v417 = vrot.slane %v404, %v416
    %v418 = vlaneseq
    %v419 = vshrl.u32 %v418, 7
    %v420 = vsub.s32 3, %v419
    %v421 = vrot.slane %v404, %v420
    %v426 = vmul.f32 %v43, %v409
    %v427 = vmul.f32 %v44, %v413
    %v428 = vmul.f32 %v45, %v417
    %v429 = vmul.f32 %v46, %v421
    %v430 = vadd.f32 %v397, %v426
    %v431 = vadd.f32 %v398, %v427
    %v432 = vadd.f32 %v399, %v428
    %v433 = vadd.f32 %v400, %v429
    %v434 = vmul.f32 %v38, -0.39583334
    %v435 = vadd.f32 %v434, %v52
    %v436 = vmul.f32 %v435, 1.442695
    %v437 = vpow.pop %v436
    %v439 = vlaneseq
    %v440 = vshrl.u32 %v439, 7
    %v441 = vsub.s32 0, %v440
    %v442 = vrot.slane %v437, %v441
    %v443 = vlaneseq
    %v444 = vshrl.u32 %v443, 7
    %v445 = vsub.s32 1, %v444
    %v446 = vrot.slane %v437, %v445
    %v447 = vlaneseq
    %v448 = vshrl.u32 %v447, 7
    %v449 = vsub.s32 2, %v448
    %v450 = vrot.slane %v437, %v449
    %v451 = vlaneseq
    %v452 = vshrl.u32 %v451, 7
    %v453 = vsub.s32 3, %v452
    %v454 = vrot.slane %v437, %v453
    %v459 = vmul.f32 %v43, %v442
    %v460 = vmul.f32 %v44, %v446
    %v461 = vmul.f32 %v45, %v450
    %v462 = vmul.f32 %v46, %v454
    %v467 = vrot.slane %v459, 1
    %v468 = vrot.slane %v460, 1
    %v469 = vrot.slane %v461, 1
    %v470 = vrot.slane %v462, 1
    %v475 = vadd.f32 %v430, %v467
    %v476 = vadd.f32 %v431, %v468
    %v477 = vadd.f32 %v432, %v469
    %v478 = vadd.f32 %v433, %v470
    %v479 = vmul.f32 %v38, 0.39583334
    %v480 = vadd.f32 %v479, %v52
    %v481 = vmul.f32 %v480, 1.442695
    %v482 = vpow.pop %v481
    %v484 = vlaneseq
    %v485 = vshrl.u32 %v484, 7
    %v486 = vsub.s32 0, %v485
    %v487 = vrot.slane %v482, %v486
    %v488 = vlaneseq
    %v489 = vshrl.u32 %v488, 7
    %v490 = vsub.s32 1, %v489
    %v491 = vrot.slane %v482, %v490
    %v492 = vlaneseq
    %v493 = vshrl.u32 %v492, 7
    %v494 = vsub.s32 2, %v493
    %v495 = vrot.slane %v482, %v494
    %v496 = vlaneseq
    %v497 = vshrl.u32 %v496, 7
    %v498 = vsub.s32 3, %v497
    %v499 = vrot.slane %v482, %v498
    %v504 = vmul.f32 %v43, %v487
    %v505 = vmul.f32 %v44, %v491
    %v506 = vmul.f32 %v45, %v495
    %v507 = vmul.f32 %v46, %v499
    %v512 = vrot.slane %v504, 2
    %v513 = vrot.slane %v505, 2
    %v514 = vrot.slane %v506, 2
    %v515 = vrot.slane %v507, 2
    %v520 = vadd.f32 %v475, %v512
    %v521 = vadd.f32 %v476, %v513
    %v522 = vadd.f32 %v477, %v514
    %v523 = vadd.f32 %v478, %v515
    %v524 = vmul.f32 %v38, 1.1875
    %v525 = vadd.f32 %v524, %v52
    %v526 = vmul.f32 %v525, 1.442695
    %v527 = vpow.pop %v526
    %v529 = vlaneseq
    %v530 = vshrl.u32 %v529, 7
    %v531 = vsub.s32 0, %v530
    %v532 = vrot.slane %v527, %v531
    %v533 = vlaneseq
    %v534 = vshrl.u32 %v533, 7
    %v535 = vsub.s32 1, %v534
    %v536 = vrot.slane %v527, %v535
    %v537 = vlaneseq
    %v538 = vshrl.u32 %v537, 7
    %v539 = vsub.s32 2, %v538
    %v540 = vrot.slane %v527, %v539
    %v541 = vlaneseq
    %v542 = vshrl.u32 %v541, 7
    %v543 = vsub.s32 3, %v542
    %v544 = vrot.slane %v527, %v543
    %v549 = vmul.f32 %v43, %v532
    %v550 = vmul.f32 %v44, %v536
    %v551 = vmul.f32 %v45, %v540
    %v552 = vmul.f32 %v46, %v544
    %v557 = vrot.slane %v549, 3
    %v558 = vrot.slane %v550, 3
    %v559 = vrot.slane %v551, 3
    %v560 = vrot.slane %v552, 3
    %v565 = vadd.f32 %v520, %v557
    %v566 = vadd.f32 %v521, %v558
    %v567 = vadd.f32 %v522, %v559
    %v568 = vadd.f32 %v523, %v560
    %v569 = vmul.f32 %v38, 1.9791666
    %v570 = vadd.f32 %v569, %v52
    %v571 = vmul.f32 %v570, 1.442695
    %v572 = vpow.pop %v571
    %v574 = vlaneseq
    %v575 = vshrl.u32 %v574, 7
    %v576 = vsub.s32 0, %v575
    %v577 = vrot.slane %v572, %v576
    %v578 = vlaneseq
    %v579 = vshrl.u32 %v578, 7
    %v580 = vsub.s32 1, %v579
    %v581 = vrot.slane %v572, %v580
    %v582 = vlaneseq
    %v583 = vshrl.u32 %v582, 7
    %v584 = vsub.s32 2, %v583
    %v585 = vrot.slane %v572, %v584
    %v586 = vlaneseq
    %v587 = vshrl.u32 %v586, 7
    %v588 = vsub.s32 3, %v587
    %v589 = vrot.slane %v572, %v588
    %v594 = vmul.f32 %v43, %v577
    %v595 = vmul.f32 %v44, %v581
    %v596 = vmul.f32 %v45, %v585
    %v597 = vmul.f32 %v46, %v589
    %v602 = vrot.slane %v594, 4
    %v603 = vrot.slane %v595, 4
    %v604 = vrot.slane %v596, 4
    %v605 = vrot.slane %v597, 4
    %v610 = vadd.f32 %v565, %v602
    %v611 = vadd.f32 %v566, %v603
    %v612 = vadd.f32 %v567, %v604
    %v613 = vadd.f32 %v568, %v605
    %v614 = vmul.f32 %v38, 2.7708333
    %v615 = vadd.f32 %v614, %v52
    %v616 = vmul.f32 %v615, 1.442695
    %v617 = vpow.pop %v616
    %v619 = vlaneseq
    %v620 = vshrl.u32 %v619, 7
    %v621 = vsub.s32 0, %v620
    %v622 = vrot.slane %v617, %v621
    %v623 = vlaneseq
    %v624 = vshrl.u32 %v623, 7
    %v625 = vsub.s32 1, %v624
    %v626 = vrot.slane %v617, %v625
    %v627 = vlaneseq
    %v628 = vshrl.u32 %v627, 7
    %v629 = vsub.s32 2, %v628
    %v630 = vrot.slane %v617, %v629
    %v631 = vlaneseq
    %v632 = vshrl.u32 %v631, 7
    %v633 = vsub.s32 3, %v632
    %v634 = vrot.slane %v617, %v633
    %v639 = vmul.f32 %v43, %v622
    %v640 = vmul.f32 %v44, %v626
    %v641 = vmul.f32 %v45, %v630
    %v642 = vmul.f32 %v46, %v634
    %v647 = vrot.slane %v639, 5
    %v648 = vrot.slane %v640, 5
    %v649 = vrot.slane %v641, 5
    %v650 = vrot.slane %v642, 5
    %v655 = vadd.f32 %v610, %v647
    %v656 = vadd.f32 %v611, %v648
    %v657 = vadd.f32 %v612, %v649
    %v658 = vadd.f32 %v613, %v650
    %v659 = vmul.f32 %v38, 3.5625
    %v660 = vadd.f32 %v659, %v52
    %v661 = vmul.f32 %v660, 1.442695
    %v662 = vpow.pop %v661
    %v664 = vlaneseq
    %v665 = vshrl.u32 %v664, 7
    %v666 = vsub.s32 0, %v665
    %v667 = vrot.slane %v662, %v666
    %v668 = vlaneseq
    %v669 = vshrl.u32 %v668, 7
    %v670 = vsub.s32 1, %v669
    %v671 = vrot.slane %v662, %v670
    %v672 = vlaneseq
    %v673 = vshrl.u32 %v672, 7
    %v674 = vsub.s32 2, %v673
    %v675 = vrot.slane %v662, %v674
    %v676 = vlaneseq
    %v677 = vshrl.u32 %v676, 7
    %v678 = vsub.s32 3, %v677
    %v679 = vrot.slane %v662, %v678
    %v684 = vmul.f32 %v43, %v667
    %v685 = vmul.f32 %v44, %v671
    %v686 = vmul.f32 %v45, %v675
    %v687 = vmul.f32 %v46, %v679
    %v692 = vrot.slane %v684, 6
    %v693 = vrot.slane %v685, 6
    %v694 = vrot.slane %v686, 6
    %v695 = vrot.slane %v687, 6
    %v700 = vadd.f32 %v655, %v692
    %v701 = vadd.f32 %v656, %v693
    %v702 = vadd.f32 %v657, %v694
    %v703 = vadd.f32 %v658, %v695
    %v704 = vmul.f32 %v38, 4.3541665
    %v705 = vadd.f32 %v704, %v52
    %v706 = vmul.f32 %v705, 1.442695
    %v707 = vpow.pop %v706
    %v709 = vlaneseq
    %v710 = vshrl.u32 %v709, 7
    %v711 = vsub.s32 0, %v710
    %v712 = vrot.slane %v707, %v711
    %v713 = vlaneseq
    %v714 = vshrl.u32 %v713, 7
    %v715 = vsub.s32 1, %v714
    %v716 = vrot.slane %v707, %v715
    %v717 = vlaneseq
    %v718 = vshrl.u32 %v717, 7
    %v719 = vsub.s32 2, %v718
    %v720 = vrot.slane %v707, %v719
    %v721 = vlaneseq
    %v722 = vshrl.u32 %v721, 7
    %v723 = vsub.s32 3, %v722
    %v724 = vrot.slane %v707, %v723
    %v729 = vmul.f32 %v43, %v712
    %v730 = vmul.f32 %v44, %v716
    %v731 = vmul.f32 %v45, %v720
    %v732 = vmul.f32 %v46, %v724
    %v737 = vrot.slane %v729, 7
    %v738 = vrot.slane %v730, 7
    %v739 = vrot.slane %v731, 7
    %v740 = vrot.slane %v732, 7
    %v745 = vadd.f32 %v700, %v737
    %v746 = vadd.f32 %v701, %v738
    %v747 = vadd.f32 %v702, %v739
    %v748 = vadd.f32 %v703, %v740
    %v749 = vmul.f32 %v38, 5.1458335
    %v750 = vadd.f32 %v749, %v52
    %v751 = vmul.f32 %v750, 1.442695
    %v752 = vpow.pop %v751
    %v754 = vlaneseq
    %v755 = vshrl.u32 %v754, 7
    %v756 = vsub.s32 0, %v755
    %v757 = vrot.slane %v752, %v756
    %v758 = vlaneseq
    %v759 = vshrl.u32 %v758, 7
    %v760 = vsub.s32 1, %v759
    %v761 = vrot.slane %v752, %v760
    %v762 = vlaneseq
    %v763 = vshrl.u32 %v762, 7
    %v764 = vsub.s32 2, %v763
    %v765 = vrot.slane %v752, %v764
    %v766 = vlaneseq
    %v767 = vshrl.u32 %v766, 7
    %v768 = vsub.s32 3, %v767
    %v769 = vrot.slane %v752, %v768
    %v774 = vmul.f32 %v47, %v757
    %v775 = vmul.f32 %v48, %v761
    %v776 = vmul.f32 %v49, %v765
    %v777 = vmul.f32 %v50, %v769
    %v778 = vadd.f32 %v745, %v774
    %v779 = vadd.f32 %v746, %v775
    %v780 = vadd.f32 %v747, %v776
    %v781 = vadd.f32 %v748, %v777
    %v782 = vmul.f32 %v38, 5.9375
    %v783 = vadd.f32 %v782, %v52
    %v784 = vmul.f32 %v783, 1.442695
    %v785 = vpow.pop %v784
    %v787 = vlaneseq
    %v788 = vshrl.u32 %v787, 7
    %v789 = vsub.s32 0, %v788
    %v790 = vrot.slane %v785, %v789
    %v791 = vlaneseq
    %v792 = vshrl.u32 %v791, 7
    %v793 = vsub.s32 1, %v792
    %v794 = vrot.slane %v785, %v793
    %v795 = vlaneseq
    %v796 = vshrl.u32 %v795, 7
    %v797 = vsub.s32 2, %v796
    %v798 = vrot.slane %v785, %v797
    %v799 = vlaneseq
    %v800 = vshrl.u32 %v799, 7
    %v801 = vsub.s32 3, %v800
    %v802 = vrot.slane %v785, %v801
    %v807 = vmul.f32 %v47, %v790
    %v808 = vmul.f32 %v48, %v794
    %v809 = vmul.f32 %v49, %v798
    %v810 = vmul.f32 %v50, %v802
    %v815 = vrot.slane %v807, 1
    %v816 = vrot.slane %v808, 1
    %v817 = vrot.slane %v809, 1
    %v818 = vrot.slane %v810, 1
    %v823 = vadd.f32 %v778, %v815
    %v824 = vadd.f32 %v779, %v816
    %v825 = vadd.f32 %v780, %v817
    %v826 = vadd.f32 %v781, %v818
    %v827 = vmul.f32 %v38, 6.7291665
    %v828 = vadd.f32 %v827, %v52
    %v829 = vmul.f32 %v828, 1.442695
    %v830 = vpow.pop %v829
    %v832 = vlaneseq
    %v833 = vshrl.u32 %v832, 7
    %v834 = vsub.s32 0, %v833
    %v835 = vrot.slane %v830, %v834
    %v836 = vlaneseq
    %v837 = vshrl.u32 %v836, 7
    %v838 = vsub.s32 1, %v837
    %v839 = vrot.slane %v830, %v838
    %v840 = vlaneseq
    %v841 = vshrl.u32 %v840, 7
    %v842 = vsub.s32 2, %v841
    %v843 = vrot.slane %v830, %v842
    %v844 = vlaneseq
    %v845 = vshrl.u32 %v844, 7
    %v846 = vsub.s32 3, %v845
    %v847 = vrot.slane %v830, %v846
    %v852 = vmul.f32 %v47, %v835
    %v853 = vmul.f32 %v48, %v839
    %v854 = vmul.f32 %v49, %v843
    %v855 = vmul.f32 %v50, %v847
    %v860 = vrot.slane %v852, 2
    %v861 = vrot.slane %v853, 2
    %v862 = vrot.slane %v854, 2
    %v863 = vrot.slane %v855, 2
    %v868 = vadd.f32 %v823, %v860
    %v869 = vadd.f32 %v824, %v861
    %v870 = vadd.f32 %v825, %v862
    %v871 = vadd.f32 %v826, %v863
    %v872 = vmul.f32 %v38, 7.5208335
    %v873 = vadd.f32 %v872, %v52
    %v874 = vmul.f32 %v873, 1.442695
    %v875 = vpow.pop %v874
    %v877 = vlaneseq
    %v878 = vshrl.u32 %v877, 7
    %v879 = vsub.s32 0, %v878
    %v880 = vrot.slane %v875, %v879
    %v881 = vlaneseq
    %v882 = vshrl.u32 %v881, 7
    %v883 = vsub.s32 1, %v882
    %v884 = vrot.slane %v875, %v883
    %v885 = vlaneseq
    %v886 = vshrl.u32 %v885, 7
    %v887 = vsub.s32 2, %v886
    %v888 = vrot.slane %v875, %v887
    %v889 = vlaneseq
    %v890 = vshrl.u32 %v889, 7
    %v891 = vsub.s32 3, %v890
    %v892 = vrot.slane %v875, %v891
    %v897 = vmul.f32 %v47, %v880
    %v898 = vmul.f32 %v48, %v884
    %v899 = vmul.f32 %v49, %v888
    %v900 = vmul.f32 %v50, %v892
    %v905 = vrot.slane %v897, 3
    %v906 = vrot.slane %v898, 3
    %v907 = vrot.slane %v899, 3
    %v908 = vrot.slane %v900, 3
    %v913 = vadd.f32 %v868, %v905
    %v914 = vadd.f32 %v869, %v906
    %v915 = vadd.f32 %v870, %v907
    %v916 = vadd.f32 %v871, %v908
    %v921 = vcombine.low %v913, %v914
    %v922 = vcombine.low %v915, %v916
    %v924 = vunpack.c.l.s4 1966171168
    %v925 = vunpack.c.0.s8 %v924
    %v926 = vlaneseq
    %v927 = vshrl.u32 %v926, 7
    %v928 = vsub.s32 %v925, %v927
    %v929 = vrot.slane %v921, %v928
    %v931 = vunpack.c.l.s4 1966171168
    %v932 = vunpack.c.0.s8 %v931
    %v933 = vlaneseq
    %v934 = vshrl.u32 %v933, 7
    %v935 = vsub.s32 %v932, %v934
    %v936 = vrot.slane %v922, %v935
    %v937 = vcombine.low %v929, %v936
    %v939 = vunpack.c.l.s4 1966171168
    %v940 = vunpack.c.0.s8 %v939
    %v941 = vlaneseq
    %v942 = vshrl.u32 %v941, 7
    %v943 = vsub.s32 %v940, %v942
    %v944 = vrot.slane %v937, %v943
    %v946 = vlaneseq
    %vm947 = vcmp.ge.s32.totalorder %v946, 0
    %vm948 = vcmp.lt.s32.totalorder %v946, 512
    %vm949 = vmand %vm947, %vm948
    %950 = vst.msk [vmem:[#allocation7] sm:$0xf] %vm949, %v944
    // Predicated region
    $region18: #{tpu_custom_call.1} parent=1 // pred_check
      _
    $region19: #{tpu_custom_call.1} parent=1 // pred_check_branch
      %952 = sbr.rel (0) target = $region21
    $region20: #{tpu_custom_call.1} parent=1 // pred_region
      %s954 = ssub.s32 64, 64
      %955 = vsyncadd [#allocation4], %s954
      %s957 = sshll.u32 [#allocation7], 4
      %s958 = int_to_ptr.vmem [resolvable:$true] %s957
      %960 = dma.vmem_to_hbm [thread:$0]  %s958, 64, %s2, [#allocation4]
    $region21: #{tpu_custom_call.1} parent=1 // pred_fallthru
      _
    // Predicated region
    $region22: #{tpu_custom_call.1} parent=1 // pred_check
      _
    $region23: #{tpu_custom_call.1} parent=1 // pred_check_branch
      %962 = sbr.rel (0) target = $region25
    $region24: #{tpu_custom_call.1} parent=1 // pred_region
      %963 = dma.done [#allocation4], 64
    $region25: #{tpu_custom_call.1} parent=1 // pred_fallthru
      _
    %964 = vsyncpa [#allocation3], 1
    %965 = vsyncpa [#allocation6], 1
    %966 = vsyncpa [#allocation4], 1

</llo_original>
